<compile_context>
chip_gen: v7x
topology: tpu7x:2x2x1
jax: 0.10.0
libtpu: 0.0.40
codegen_flags: <defaults>
</compile_context>

<pallas_src>
import functools

import jax
import jax.numpy as jnp
from jax.experimental import pallas as pl
from jax.experimental.pallas import tpu as pltpu


# --------------------------------------------------------------------------- #
# Kernel
# --------------------------------------------------------------------------- #
def _patched_kernel(shift_ref, x_ref, m_ref, patched_ref, inv_ref, *, blackout):
    # shift_ref:   (1,) f32 in SMEM (runtime scalar)
    # x_ref:       (N, C, rt, 128) image tile -- VMEM-resident across the mask loop
    # m_ref:       (N, 1, rt, 128) one mask tile
    # patched_ref: (N, C, rt, 128)
    # inv_ref:     (N, 1, rt, 128)
    shift = shift_ref[0]
    x = x_ref[...].astype(jnp.float32)
    m = m_ref[...].astype(jnp.float32)
    inv = 1.0 - m

    if blackout:
        fill = shift
    else:
        # Grayscale channel mean computed in-kernel from the resident tile:
        # a static C-term add over a leading dim (pure VALU, slots have slack).
        c = x.shape[1]
        g = x[:, 0:1]
        for ci in range(1, c):
            g = g + x[:, ci:ci + 1]
        fill = g * (1.0 / c) + shift

    patched_ref[...] = (x * m + fill * inv).astype(patched_ref.dtype)
    inv_ref[...] = inv.astype(inv_ref.dtype)


# --------------------------------------------------------------------------- #
# Tiling helpers
# --------------------------------------------------------------------------- #
def _vmem_limit_bytes():
    """Generation-aware scoped-VMEM limit: ~48 MiB on v7x (64 MiB physical),
    ~96 MiB on 128 MiB parts, with headroom for Mosaic internal scratch."""
    try:
        cap = int(pltpu.get_tpu_info().vmem_capacity_bytes)
    except Exception:
        cap = 64 << 20
    return int(min(max(cap - (16 << 20), 32 << 20), 96 << 20))


def _choose_rows(R, n, c, *, x_bytes, mask_bytes, out_bytes, inv_bytes,
                 lane, budget_bytes):
    """Largest sublane row count rt (multiple of 8 dividing R, or the full
    extent R) whose double-buffered working set fits in budget_bytes.
    Accounts for (8,128) sublane padding when rt < 8."""
    def tile_bytes(rt):
        rp = max(8, ((rt + 7) // 8) * 8)      # sublane padding inside VMEM
        per = lane * rp * n * (c * (x_bytes + out_bytes) + mask_bytes + inv_bytes)
        return 2 * per                        # double-buffered pipeline copies
    if R % 8 == 0 and R > 8:
        cands = [r for r in range(R, 0, -8) if R % r == 0]
    else:
        # Small or non-multiple-of-8 extents: full-extent block is always legal.
        cands = [R]
    for rt in cands:
        if tile_bytes(rt) <= budget_bytes:
            return rt
    return cands[-1]


# --------------------------------------------------------------------------- #
# Wrapper
# --------------------------------------------------------------------------- #
@functools.partial(jax.jit,
                   static_argnames=("blackout", "out_dtype", "inv_dtype", "keep_flat"))
def _patched_inputs_impl(x, masks, shift, *, blackout, out_dtype, inv_dtype, keep_flat):
    N, C, H, W = x.shape
    M = masks.shape[0]
    HW = H * W

    # (..., R, 128) layout: lanes fully dense, spatial rows in the sublane dim,
    # C and the singleton mask dim stay out of the (8,128) vreg tile.
    if HW % 128 == 0:
        L = 128
        R = HW // L
    else:
        # TODO(synk): pad HW to a multiple of 128 for non-aligned images; this
        # fallback keeps the full spatial extent in the (padded) lane dim.
        L = HW
        R = 1

    x4 = x.reshape(N, C, R, L)
    m5 = masks.reshape(M, N, 1, R, L)

    out_bytes = jnp.dtype(out_dtype).itemsize
    inv_bytes = jnp.dtype(inv_dtype).itemsize
    vmem_limit = _vmem_limit_bytes()
    rt = _choose_rows(R, N, C,
                      x_bytes=x.dtype.itemsize,
                      mask_bytes=masks.dtype.itemsize,
                      out_bytes=out_bytes, inv_bytes=inv_bytes,
                      lane=L, budget_bytes=vmem_limit - (8 << 20))
    S = R // rt

    kernel = functools.partial(_patched_kernel, blackout=blackout)

    in_specs = [
        pl.BlockSpec(memory_space=pltpu.MemorySpace.SMEM),                 # mask_shift
        pl.BlockSpec((N, C, rt, L), lambda s, m: (0, 0, s, 0)),            # x (resident over m)
        pl.BlockSpec((None, N, 1, rt, L), lambda s, m: (m, 0, 0, s, 0)),   # mask
    ]
    out_specs = [
        pl.BlockSpec((None, N, C, rt, L), lambda s, m: (m, 0, 0, s, 0)),   # patched
        pl.BlockSpec((None, N, 1, rt, L), lambda s, m: (m, 0, 0, s, 0)),   # inverse mask
    ]
    out_shape = (
        jax.ShapeDtypeStruct((M, N, C, R, L), out_dtype),
        jax.ShapeDtypeStruct((M, N, 1, R, L), inv_dtype),
    )

    elems = M * N * C * HW
    bytes_accessed = (N * C * HW * x.dtype.itemsize          # x read once (resident over masks)
                      + M * N * HW * masks.dtype.itemsize    # masks read
                      + M * N * C * HW * out_bytes           # patched write
                      + M * N * HW * inv_bytes)              # inverse-mask write

    patched, inv = pl.pallas_call(
        kernel,
        out_shape=out_shape,
        grid_spec=pltpu.PrefetchScalarGridSpec(
            num_scalar_prefetch=0,
            # Invariant: mask index (m) is innermost and x's index_map depends
            # only on s, so x is read from HBM once per spatial tile, not once
            # per mask.  Keep this ordering.
            grid=(S, M),
            in_specs=in_specs,
            out_specs=out_specs,
        ),
        compiler_params=pltpu.CompilerParams(
            dimension_semantics=("parallel", "parallel"),
            vmem_limit_bytes=vmem_limit,
        ),
        cost_estimate=pl.CostEstimate(flops=6 * elems, transcendentals=0,
                                      bytes_accessed=int(bytes_accessed)),
    )(shift, x4, m5)

    if keep_flat:
        # Lane-dense (M, N, C, R, 128) layout -- no relayout copy.
        return patched, inv
    # NOTE: splitting back to (H, W) with W < 128 is a full relayout copy on
    # TPU; pass keep_flat=True if the consumer can take the flattened layout.
    return patched.reshape(M, N, C, H, W), inv.reshape(M, N, 1, H, W)


def patched_inputs(x, masks, *, blackout, mask_shift=2.01,
                   out_dtype=None, inv_dtype=None, keep_flat=False):
    """JAX/Pallas equivalent of PatchedInputs(blackout).forward(x, masks, mask_shift).

    x:     (N, C, H, W)
    masks: list of (N, 1, H, W) arrays, or a stacked (M, N, 1, H, W) array.

    Returns stacked arrays (avoids M per-mask HBM copies):
      patched:       (M, N, C, H, W)   [or (M, N, C, HW//128, 128) if keep_flat]
      inverse_masks: (M, N, 1, H, W)   [same note]

    out_dtype=jnp.bfloat16 halves the dominant patched HBM write (compute stays
    f32 in-kernel); inv_dtype=jnp.bfloat16 is exact for 0/1 inverse masks.
    """
    if isinstance(masks, (list, tuple)):
        masks = jnp.stack(masks, axis=0)
    if not jnp.issubdtype(masks.dtype, jnp.floating):
        masks = masks.astype(jnp.float32)
    shift = jnp.full((1,), mask_shift, dtype=jnp.float32)
    out_dt = jnp.dtype(out_dtype) if out_dtype is not None else jnp.dtype(x.dtype)
    inv_dt = jnp.dtype(inv_dtype) if inv_dtype is not None else jnp.dtype(masks.dtype)
    return _patched_inputs_impl(x, masks, shift, blackout=bool(blackout),
                                out_dtype=out_dt, inv_dtype=inv_dt,
                                keep_flat=bool(keep_flat))


# --------------------------------------------------------------------------- #
# Reference + test
# --------------------------------------------------------------------------- #
def _reference(x, masks_list, blackout, mask_shift=2.01):
    inv = [1.0 - m for m in masks_list]
    if blackout:
        p = [x * m + mask_shift * im for m, im in zip(masks_list, inv)]
    else:
        g = jnp.mean(x, axis=1, keepdims=True)
        p = [x * m + (g + mask_shift) * im for m, im in zip(masks_list, inv)]
    return jnp.stack(p, axis=0), jnp.stack(inv, axis=0)


if __name__ == "__main__":
    key = jax.random.PRNGKey(0)
    k_x, k_m0, k_m1, k_m2 = jax.random.split(key, 4)

    # N=2, C=3 (RGB, as the module assumes), H=W=16 -> HW=256 (2 rows of 128), M=3 masks
    N, C, H, W = 2, 3, 16, 16
    x = jax.random.uniform(k_x, (N, C, H, W), dtype=jnp.float32)
    masks = [
        (jax.random.uniform(k_m0, (N, 1, H, W)) > 0.5).astype(jnp.float32),
        (jax.random.uniform(k_m1, (N, 1, H, W)) > 0.5).astype(jnp.float32),
        (jax.random.uniform(k_m2, (N, 1, H, W)) > 0.5).astype(jnp.float32),
    ]

    ok = True
    for blackout in (True, False):
        patched, inv = patched_inputs(x, masks, blackout=blackout)
        patched = jax.block_until_ready(patched)
        inv = jax.block_until_ready(inv)
        ref_p, ref_inv = _reference(x, masks, blackout)
        ok &= bool(jnp.allclose(patched, ref_p, atol=1e-5, rtol=1e-5))
        ok &= bool(jnp.allclose(inv, ref_inv, atol=1e-5, rtol=1e-5))

    print("KERNEL_OK" if ok else "KERNEL_MISMATCH")
</pallas_src>

<mosaic_0001>
module attributes {stable_mosaic.version = 11 : i64} {
  func.func @_patched_kernel(%arg0: i32, %arg1: i32, %arg2: memref<1xf32, #tpu.memory_space<smem>>, %arg3: memref<2x3x2x128xf32, #tpu.memory_space<vmem>>, %arg4: memref<1x2x1x2x128xf32, #tpu.memory_space<vmem>>, %arg5: memref<1x2x3x2x128xf32, #tpu.memory_space<vmem>>, %arg6: memref<1x2x1x2x128xf32, #tpu.memory_space<vmem>>) attributes {dimension_semantics = [#tpu.dimension_semantics<parallel>, #tpu.dimension_semantics<parallel>], iteration_bounds = array<i64: 1, 3>, scalar_prefetch = 0 : i64, scratch_operands = 0 : i64, tpu.core_type = #tpu.core_type<tc>, window_params = [{transform_indices = @transform_0, window_bounds = array<i64: 1>}, {transform_indices = @transform_1, window_bounds = array<i64: 2, 3, 2, 128>}, {transform_indices = @transform_2, window_bounds = array<i64: 1, 2, 1, 2, 128>}, {transform_indices = @transform_3, window_bounds = array<i64: 1, 2, 3, 2, 128>}, {transform_indices = @transform_4, window_bounds = array<i64: 1, 2, 1, 2, 128>}]} {
    %c0 = arith.constant 0 : index
    %0 = memref.load %arg2[%c0] : memref<1xf32, #tpu.memory_space<smem>>
    %c0_0 = arith.constant 0 : index
    %c0_1 = arith.constant 0 : index
    %c0_2 = arith.constant 0 : index
    %c0_3 = arith.constant 0 : index
    %1 = vector.load %arg3[%c0_0, %c0_1, %c0_2, %c0_3] : memref<2x3x2x128xf32, #tpu.memory_space<vmem>>, vector<2x3x2x128xf32>
    %c0_4 = arith.constant 0 : index
    %c0_5 = arith.constant 0 : index
    %c0_6 = arith.constant 0 : index
    %c0_7 = arith.constant 0 : index
    %c0_8 = arith.constant 0 : index
    %2 = vector.load %arg4[%c0_4, %c0_5, %c0_6, %c0_7, %c0_8] : memref<1x2x1x2x128xf32, #tpu.memory_space<vmem>>, vector<1x2x1x2x128xf32>
    %3 = vector.shape_cast %2 : vector<1x2x1x2x128xf32> to vector<2x1x2x128xf32>
    %cst = arith.constant 1.000000e+00 : f32
    %4 = vector.broadcast %cst : f32 to vector<2x1x2x128xf32>
    %5 = arith.subf %4, %3 : vector<2x1x2x128xf32>
    %6 = vector.broadcast %3 : vector<2x1x2x128xf32> to vector<2x3x2x128xf32>
    %7 = arith.mulf %1, %6 : vector<2x3x2x128xf32>
    %8 = vector.broadcast %0 : f32 to vector<2x1x2x128xf32>
    %9 = arith.mulf %8, %5 : vector<2x1x2x128xf32>
    %10 = vector.broadcast %9 : vector<2x1x2x128xf32> to vector<2x3x2x128xf32>
    %11 = arith.addf %7, %10 : vector<2x3x2x128xf32>
    %c0_9 = arith.constant 0 : index
    %c0_10 = arith.constant 0 : index
    %c0_11 = arith.constant 0 : index
    %c0_12 = arith.constant 0 : index
    %c0_13 = arith.constant 0 : index
    %12 = vector.load %arg5[%c0_9, %c0_10, %c0_11, %c0_12, %c0_13] : memref<1x2x3x2x128xf32, #tpu.memory_space<vmem>>, vector<1x2x3x2x128xf32>
    %13 = vector.shape_cast %12 : vector<1x2x3x2x128xf32> to vector<2x3x2x128xf32>
    %14 = vector.shape_cast %11 : vector<2x3x2x128xf32> to vector<1x2x3x2x128xf32>
    tpu.vector_store %arg5[%c0_9, %c0_10, %c0_11, %c0_12, %c0_13], %14 {strides = array<i32>} : memref<1x2x3x2x128xf32, #tpu.memory_space<vmem>>, vector<1x2x3x2x128xf32>,
    %c0_14 = arith.constant 0 : index
    %c0_15 = arith.constant 0 : index
    %c0_16 = arith.constant 0 : index
    %c0_17 = arith.constant 0 : index
    %c0_18 = arith.constant 0 : index
    %15 = vector.load %arg6[%c0_14, %c0_15, %c0_16, %c0_17, %c0_18] : memref<1x2x1x2x128xf32, #tpu.memory_space<vmem>>, vector<1x2x1x2x128xf32>
    %16 = vector.shape_cast %15 : vector<1x2x1x2x128xf32> to vector<2x1x2x128xf32>
    %17 = vector.shape_cast %5 : vector<2x1x2x128xf32> to vector<1x2x1x2x128xf32>
    tpu.vector_store %arg6[%c0_14, %c0_15, %c0_16, %c0_17, %c0_18], %17 {strides = array<i32>} : memref<1x2x1x2x128xf32, #tpu.memory_space<vmem>>, vector<1x2x1x2x128xf32>,
    return
  }
  func.func @transform_0(%arg0: i32, %arg1: i32) -> i32 {
    %c0_i32 = arith.constant 0 : i32
    %c0_i32_0 = arith.constant 0 : i32
    return %c0_i32 : i32
  }
  func.func @transform_1(%arg0: i32, %arg1: i32) -> (i32, i32, i32, i32) {
    %c0_i32 = arith.constant 0 : i32
    %c0_i32_0 = arith.constant 0 : i32
    %c0_i32_1 = arith.constant 0 : i32
    %c0_i32_2 = arith.constant 0 : i32
    return %c0_i32, %c0_i32_0, %arg0, %c0_i32_1 : i32, i32, i32, i32
  }
  func.func @transform_2(%arg0: i32, %arg1: i32) -> (i32, i32, i32, i32, i32) {
    %c0_i32 = arith.constant 0 : i32
    %c0_i32_0 = arith.constant 0 : i32
    %c0_i32_1 = arith.constant 0 : i32
    %c0_i32_2 = arith.constant 0 : i32
    return %arg1, %c0_i32, %c0_i32_0, %arg0, %c0_i32_1 : i32, i32, i32, i32, i32
  }
  func.func @transform_3(%arg0: i32, %arg1: i32) -> (i32, i32, i32, i32, i32) {
    %c0_i32 = arith.constant 0 : i32
    %c0_i32_0 = arith.constant 0 : i32
    %c0_i32_1 = arith.constant 0 : i32
    %c0_i32_2 = arith.constant 0 : i32
    return %arg1, %c0_i32, %c0_i32_0, %arg0, %c0_i32_1 : i32, i32, i32, i32, i32
  }
  func.func @transform_4(%arg0: i32, %arg1: i32) -> (i32, i32, i32, i32, i32) {
    %c0_i32 = arith.constant 0 : i32
    %c0_i32_0 = arith.constant 0 : i32
    %c0_i32_1 = arith.constant 0 : i32
    %c0_i32_2 = arith.constant 0 : i32
    return %arg1, %c0_i32, %c0_i32_0, %arg0, %c0_i32_1 : i32, i32, i32, i32, i32
  }
}

</mosaic_0001>

<llo_original>
// kernel: _patched_inputs_impl.1
$region0: #{_patched_inputs_impl.1}
  #allocation0 [shape = 'u32[]', space=smem, size = 0x4, offset = 0x4, fixed_abs, tag = 'smem constant byte address 0x4 - core index']
  #allocation1 [shape = 'u32[144,128]{1,0:T(1,128)}', space=vmem, size = 0x12000, scoped, tag = 'internal scratch']
  #allocation2 [shape = 'f32[1]{0:T(128)S(6)}', space=smem, size = 0x200, scoped, tag = 'scoped memory for _patched_inputs_impl.1']
  %s0 = inlined_call_operand.<no memory space> [shape: f32[1], index: 0, kind: input, shape index: {}]
  %s1 = inlined_call_operand.vmem [shape: f32[2,3,2,128], index: 1, kind: input, shape index: {}]
  %s2 = inlined_call_operand.vmem [shape: f32[3,2,1,2,128], index: 2, kind: input, shape index: {}]
  %s3 = inlined_call_operand.vmem [shape: f32[3,2,3,2,128], index: 3, kind: output, shape index: {0}]
  %s4 = inlined_call_operand.vmem [shape: f32[3,2,1,2,128], index: 4, kind: output, shape index: {1}]
  %5 = xla_tuple %s3, %s4
  %s6 = sld [smem:[#allocation0]]
  $region53: #{_patched_inputs_impl.1} parent=0
    _
  %s8 = ssub.s32 1, %s6
  %s9 = scalar_select 0, %s8, %s6
  %10 = sst [smem:[#allocation2]] %s0
  loop: start=0, step=1, limit=5
  $region2: #{_patched_inputs_impl.1} parent=0 // loop_pre_header
    _
  $region3: #{_patched_inputs_impl.1} parent=0 // loop_header
    %s12 = sphi 0, %s16
    %p13 = scmp.ge.s32.totalorder %s12, 5
    %s19 = sphi 0, %s31
    %s20 = sphi 0, %s27
    %s21 = sphi 0, %s19
    %s22 = sphi 0, %s20
    %s23 = sphi 0, %s21
    %s24 = sphi 0, %s22
    %s32 = sphi 0, %s32
    %s34 = sphi 0, %s32
    %s35 = sphi 0, %s34
    %s49 = sphi 0, %s35
    %s55 = sphi 0, %s57
    %s58 = sphi 0, %s55
    %s59 = sphi 0, %s58
    %s75 = sphi 0, %s59
    %s83 = sphi 0, %s85
    %s86 = sphi 0, %s83
    %s87 = sphi 0, %s86
    %s103 = sphi 0, %s87
    %s111 = sphi 0, %s113
    %s114 = sphi 0, %s111
    %s115 = sphi 0, %s114
    %s131 = sphi 0, %s115
    %s139 = sphi 0, %s141
    %s142 = sphi 0, %s139
    %s143 = sphi 0, %s142
    %s159 = sphi 0, %s143
  $region4: #{_patched_inputs_impl.1} parent=0 // loop_header_branch
    %15 = sbr.rel (%p13) target = $region8
  $region5: #{_patched_inputs_impl.1} parent=0 // loop_body
    %s17 = ssub.s32 %s12, 1
    %s18 = ssub.s32 %s12, 2
    %s25 = sadd.s32 1, %s20
    %p26 = scmp.ge.s32.totalorder %s25, 3
    %s27 = scalar_select %p26, 0, %s25
    %s28 = sadd.s32 1, %s19
    %s29 = scalar_select %p26, %s28, %s19
    %p30 = scmp.ge.s32.totalorder %s29, 1
    %s31 = scalar_select %p30, 0, %s29
    %s33 = sadd.s32 %s32, 1
    %p36 = scmp.eq.s32.totalorder %s12, 2
    %p37 = scmp.ne.s32.totalorder %s32, %s34
    %p38 = scmp.eq.s32.totalorder %s12, 0
    %p39 = por %p37, %p38
    %p40 = scmp.ne.s32.totalorder %s32, %s34
    %p41 = scmp.eq.s32.totalorder %s17, 2
    %p42 = por %p40, %p41
    %p43 = scmp.ne.s32.totalorder %s34, %s35
    %p44 = scmp.eq.s32.totalorder %s17, 0
    %p45 = por %p43, %p44
    %p46 = scmp.ne.s32.totalorder %s34, %s35
    %p47 = scmp.eq.s32.totalorder %s18, 2
    %p48 = por %p46, %p47
    %p50 = scmp.ne.s32.totalorder %s35, %s49
    %p51 = scmp.eq.s32.totalorder %s18, 0
    %p52 = por %p50, %p51
    %s53 = ssub.s32 %s19, %s31
    %p54 = scmp.eq.s32.totalorder %s53, 0
    %s56 = sadd.s32 %s55, 1
    %s57 = scalar_select %p54, %s55, %s56
    %p60 = pneg %p54
    %p61 = scmp.eq.s32.totalorder %s12, 2
    %p62 = por %p60, %p61
    %p63 = scmp.ne.s32.totalorder %s55, %s58
    %p64 = scmp.eq.s32.totalorder %s12, 0
    %p65 = por %p63, %p64
    %p66 = scmp.ne.s32.totalorder %s55, %s58
    %p67 = scmp.eq.s32.totalorder %s17, 2
    %p68 = por %p66, %p67
    %p69 = scmp.ne.s32.totalorder %s58, %s59
    %p70 = scmp.eq.s32.totalorder %s17, 0
    %p71 = por %p69, %p70
    %p72 = scmp.ne.s32.totalorder %s58, %s59
    %p73 = scmp.eq.s32.totalorder %s18, 2
    %p74 = por %p72, %p73
    %p76 = scmp.ne.s32.totalorder %s59, %s75
    %p77 = scmp.eq.s32.totalorder %s18, 0
    %p78 = por %p76, %p77
    %s79 = ssub.s32 %s20, %s27
    %s80 = ssub.s32 %s19, %s31
    %s81 = sor.u32 %s79, %s80
    %p82 = scmp.eq.s32.totalorder %s81, 0
    %s84 = sadd.s32 %s83, 1
    %s85 = scalar_select %p82, %s83, %s84
    %p88 = pneg %p82
    %p89 = scmp.eq.s32.totalorder %s12, 2
    %p90 = por %p88, %p89
    %p91 = scmp.ne.s32.totalorder %s83, %s86
    %p92 = scmp.eq.s32.totalorder %s12, 0
    %p93 = por %p91, %p92
    %p94 = scmp.ne.s32.totalorder %s83, %s86
    %p95 = scmp.eq.s32.totalorder %s17, 2
    %p96 = por %p94, %p95
    %p97 = scmp.ne.s32.totalorder %s86, %s87
    %p98 = scmp.eq.s32.totalorder %s17, 0
    %p99 = por %p97, %p98
    %p100 = scmp.ne.s32.totalorder %s86, %s87
    %p101 = scmp.eq.s32.totalorder %s18, 2
    %p102 = por %p100, %p101
    %p104 = scmp.ne.s32.totalorder %s87, %s103
    %p105 = scmp.eq.s32.totalorder %s18, 0
    %p106 = por %p104, %p105
    %s107 = ssub.s32 %s20, %s27
    %s108 = ssub.s32 %s19, %s31
    %s109 = sor.u32 %s107, %s108
    %p110 = scmp.eq.s32.totalorder %s109, 0
    %s112 = sadd.s32 %s111, 1
    %s113 = scalar_select %p110, %s111, %s112
    %p116 = pneg %p110
    %p117 = scmp.eq.s32.totalorder %s12, 2
    %p118 = por %p116, %p117
    %p119 = scmp.ne.s32.totalorder %s111, %s114
    %p120 = scmp.eq.s32.totalorder %s12, 0
    %p121 = por %p119, %p120
    %p122 = scmp.ne.s32.totalorder %s111, %s114
    %p123 = scmp.eq.s32.totalorder %s17, 2
    %p124 = por %p122, %p123
    %p125 = scmp.ne.s32.totalorder %s114, %s115
    %p126 = scmp.eq.s32.totalorder %s17, 0
    %p127 = por %p125, %p126
    %p128 = scmp.ne.s32.totalorder %s114, %s115
    %p129 = scmp.eq.s32.totalorder %s18, 2
    %p130 = por %p128, %p129
    %p132 = scmp.ne.s32.totalorder %s115, %s131
    %p133 = scmp.eq.s32.totalorder %s18, 0
    %p134 = por %p132, %p133
    %s135 = ssub.s32 %s20, %s27
    %s136 = ssub.s32 %s19, %s31
    %s137 = sor.u32 %s135, %s136
    %p138 = scmp.eq.s32.totalorder %s137, 0
    %s140 = sadd.s32 %s139, 1
    %s141 = scalar_select %p138, %s139, %s140
    %p144 = pneg %p138
    %p145 = scmp.eq.s32.totalorder %s12, 2
    %p146 = por %p144, %p145
    %p147 = scmp.ne.s32.totalorder %s139, %s142
    %p148 = scmp.eq.s32.totalorder %s12, 0
    %p149 = por %p147, %p148
    %p150 = scmp.ne.s32.totalorder %s139, %s142
    %p151 = scmp.eq.s32.totalorder %s17, 2
    %p152 = por %p150, %p151
    %p153 = scmp.ne.s32.totalorder %s142, %s143
    %p154 = scmp.eq.s32.totalorder %s17, 0
    %p155 = por %p153, %p154
    %p156 = scmp.ne.s32.totalorder %s142, %s143
    %p157 = scmp.eq.s32.totalorder %s18, 2
    %p158 = por %p156, %p157
    %p160 = scmp.ne.s32.totalorder %s143, %s159
    %p161 = scmp.eq.s32.totalorder %s18, 0
    %p162 = por %p160, %p161
    %p163 = scmp.le.s32.totalorder 1, %s12
    %p164 = scmp.lt.s32.totalorder %s12, 4
    %p165 = pnand %p163, %p164
    %p166 = pneg %p165
    // Predicated region
    $region9: #{_patched_inputs_impl.1} parent=5 // pred_check
      _
    $region10: #{_patched_inputs_impl.1} parent=5 // pred_check_branch
      %168 = sbr.rel (%p165) target = $region12
    $region11: #{_patched_inputs_impl.1} parent=5 // pred_region
      %s169 = ssub.s32 %s12, 1
      // Predicated region
      $region13: #{_patched_inputs_impl.1} parent=11 // pred_check
        %p170 = pneg %p45
      $region14: #{_patched_inputs_impl.1} parent=11 // pred_check_branch
        %172 = sbr.rel (%p170) target = $region16
      $region15: #{_patched_inputs_impl.1} parent=11 // pred_region
        _
      $region16: #{_patched_inputs_impl.1} parent=11 // pred_fallthru
        _
      // Predicated region
      $region17: #{_patched_inputs_impl.1} parent=11 // pred_check
        %p173 = pneg %p71
      $region18: #{_patched_inputs_impl.1} parent=11 // pred_check_branch
        %175 = sbr.rel (%p173) target = $region20
      $region19: #{_patched_inputs_impl.1} parent=11 // pred_region
        %p176 = scmp.lt.s32.totalorder %s21, 0
        %s177 = scalar_select %p176, %s21, 0
        %s178 = smul.addr %s177, 2
        %s179 = scalar_lea.vmem %s1, %s178
      $region20: #{_patched_inputs_impl.1} parent=11 // pred_fallthru
        _
    $region12: #{_patched_inputs_impl.1} parent=5 // pred_fallthru
      _
    %p180 = scmp.lt.s32.totalorder %s12, 3
    // Predicated region
    $region21: #{_patched_inputs_impl.1} parent=5 // pred_check
      %p181 = pneg %p180
    $region22: #{_patched_inputs_impl.1} parent=5 // pred_check_branch
      %183 = sbr.rel (%p181) target = $region24
    $region23: #{_patched_inputs_impl.1} parent=5 // pred_region
      // Predicated region
      $region25: #{_patched_inputs_impl.1} parent=23 // pred_check
        %p184 = pneg %p93
      $region26: #{_patched_inputs_impl.1} parent=23 // pred_check_branch
        %186 = sbr.rel (%p184) target = $region28
      $region27: #{_patched_inputs_impl.1} parent=23 // pred_region
        %p187 = scmp.lt.s32.totalorder %s20, 2
        %s188 = scalar_select %p187, %s20, 2
        %p189 = scmp.lt.s32.totalorder %s19, 0
        %s190 = scalar_select %p189, %s19, 0
        %s191 = smul.addr %s188, 2
        %s192 = sadd.s32 %s190, %s191
        %s193 = smul.addr %s192, 2
        %s194 = scalar_lea.vmem %s2, %s193
      $region28: #{_patched_inputs_impl.1} parent=23 // pred_fallthru
        _
    $region24: #{_patched_inputs_impl.1} parent=5 // pred_fallthru
      _
    %p195 = scmp.le.s32.totalorder 1, %s12
    %p196 = scmp.lt.s32.totalorder %s12, 4
    %p197 = pnand %p195, %p196
    %p198 = pneg %p197
    // Predicated region
    $region29: #{_patched_inputs_impl.1} parent=5 // pred_check
      _
    $region30: #{_patched_inputs_impl.1} parent=5 // pred_check_branch
      %200 = sbr.rel (%p197) target = $region32
    $region31: #{_patched_inputs_impl.1} parent=5 // pred_region
      %s201 = ssub.s32 %s12, 1
      %p202 = pneg %p45
      %p203 = pneg %p42
      %p204 = scmp.lt.s32.totalorder %s21, 0
      %s205 = scalar_select %p204, %s21, 0
      %s206 = smul.addr %s205, 2
      %s207 = scalar_lea.vmem %s1, %s206
      %p208 = pneg %p71
      %p209 = pneg %p68
      %p210 = scmp.lt.s32.totalorder %s22, 2
      %s211 = scalar_select %p210, %s22, 2
      %p212 = scmp.lt.s32.totalorder %s21, 0
      %s213 = scalar_select %p212, %s21, 0
      %s214 = smul.addr %s211, 2
      %s215 = sadd.s32 %s213, %s214
      %s216 = smul.addr %s215, 2
      %s217 = scalar_lea.vmem %s2, %s216
      %p218 = pneg %p99
      %p219 = pneg %p96
      %p220 = pneg %p127
      %p221 = pneg %p124
      %p222 = scmp.lt.s32.totalorder %s22, 2
      %s223 = scalar_select %p222, %s22, 2
      %p224 = scmp.lt.s32.totalorder %s21, 0
      %s225 = scalar_select %p224, %s21, 0
      %s226 = smul.addr %s223, 6
      %s227 = sadd.s32 %s225, %s226
      %s228 = smul.addr %s227, 2
      %s229 = scalar_lea.vmem %s3, %s228
      %p230 = pneg %p155
      %p231 = pneg %p152
      %p232 = scmp.lt.s32.totalorder %s22, 2
      %s233 = scalar_select %p232, %s22, 2
      %p234 = scmp.lt.s32.totalorder %s21, 0
      %s235 = scalar_select %p234, %s21, 0
      %s236 = smul.addr %s233, 2
      %s237 = sadd.s32 %s235, %s236
      %s238 = smul.addr %s237, 2
      %s239 = scalar_lea.vmem %s4, %s238
      %p240 = scmp.lt.s32.totalorder %s21, 0
      %s241 = scalar_select %p240, %s21, 0
      %s242 = smul.addr %s241, 2
      %s243 = scalar_lea.vmem %s1, %s242
      %p244 = scmp.lt.s32.totalorder %s22, 2
      %s245 = scalar_select %p244, %s22, 2
      %p246 = scmp.lt.s32.totalorder %s21, 0
      %s247 = scalar_select %p246, %s21, 0
      %s248 = smul.addr %s245, 2
      %s249 = sadd.s32 %s247, %s248
      %s250 = smul.addr %s249, 2
      %s251 = scalar_lea.vmem %s2, %s250
      %p252 = scmp.lt.s32.totalorder %s22, 2
      %s253 = scalar_select %p252, %s22, 2
      %p254 = scmp.lt.s32.totalorder %s21, 0
      %s255 = scalar_select %p254, %s21, 0
      %s256 = smul.addr %s253, 6
      %s257 = sadd.s32 %s255, %s256
      %s258 = smul.addr %s257, 2
      %s259 = scalar_lea.vmem %s3, %s258
      %p260 = scmp.lt.s32.totalorder %s22, 2
      %s261 = scalar_select %p260, %s22, 2
      %p262 = scmp.lt.s32.totalorder %s21, 0
      %s263 = scalar_select %p262, %s21, 0
      %s264 = smul.addr %s261, 2
      %s265 = sadd.s32 %s263, %s264
      %s266 = smul.addr %s265, 2
      %s267 = scalar_lea.vmem %s4, %s266
      %s268 = sld [smem:[#allocation2]]
      %v269 = vld [vmem:[%s243] sm:$0x3]
      %v270 = vld [vmem:[%s243 + $0x2] sm:$0x3]
      %v271 = vld [vmem:[%s243 + $0x4] sm:$0x3]
      %v272 = vld [vmem:[%s243 + $0x6] sm:$0x3]
      %v273 = vld [vmem:[%s243 + $0x8] sm:$0x3]
      %v274 = vld [vmem:[%s243 + $0xa] sm:$0x3]
      %v275 = vld [vmem:[%s251] sm:$0x3]
      %v276 = vld [vmem:[%s251 + $0x2] sm:$0x3]
      %v277 = vsub.f32 1.0, %v275
      %v278 = vsub.f32 1.0, %v276
      %v279 = vmul.f32 %v269, %v275
      %v280 = vmul.f32 %v270, %v275
      %v281 = vmul.f32 %v271, %v275
      %v282 = vmul.f32 %v272, %v276
      %v283 = vmul.f32 %v273, %v276
      %v284 = vmul.f32 %v274, %v276
      %v285 = vstv %s268
      %v286 = vmul.f32 %v285, %v277
      %v287 = vmul.f32 %v285, %v278
      %v288 = vadd.f32 %v279, %v286
      %v289 = vadd.f32 %v280, %v286
      %v290 = vadd.f32 %v281, %v286
      %v291 = vadd.f32 %v282, %v287
      %v292 = vadd.f32 %v283, %v287
      %v293 = vadd.f32 %v284, %v287
      %294 = vst [vmem:[%s259] sm:$0x3] %v288
      %295 = vst [vmem:[%s259 + $0x2] sm:$0x3] %v289
      %296 = vst [vmem:[%s259 + $0x4] sm:$0x3] %v290
      %297 = vst [vmem:[%s259 + $0x6] sm:$0x3] %v291
      %298 = vst [vmem:[%s259 + $0x8] sm:$0x3] %v292
      %299 = vst [vmem:[%s259 + $0xa] sm:$0x3] %v293
      %300 = vst [vmem:[%s267] sm:$0x3] %v277
      %301 = vst [vmem:[%s267 + $0x2] sm:$0x3] %v278
      %p302 = scmp.lt.s32.totalorder %s22, 2
      %s303 = scalar_select %p302, %s22, 2
      %p304 = scmp.lt.s32.totalorder %s21, 0
      %s305 = scalar_select %p304, %s21, 0
      %s306 = smul.addr %s303, 6
      %s307 = sadd.s32 %s305, %s306
      %s308 = smul.addr %s307, 2
      %s309 = scalar_lea.vmem %s3, %s308
      %p310 = scmp.lt.s32.totalorder %s22, 2
      %s311 = scalar_select %p310, %s22, 2
      %p312 = scmp.lt.s32.totalorder %s21, 0
      %s313 = scalar_select %p312, %s21, 0
      %s314 = smul.addr %s311, 2
      %s315 = sadd.s32 %s313, %s314
      %s316 = smul.addr %s315, 2
      %s317 = scalar_lea.vmem %s4, %s316
      // Predicated region
      $region33: #{_patched_inputs_impl.1} parent=31 // pred_check
        %p318 = pneg %p124
      $region34: #{_patched_inputs_impl.1} parent=31 // pred_check_branch
        %320 = sbr.rel (%p318) target = $region36
      $region35: #{_patched_inputs_impl.1} parent=31 // pred_region
        _
      $region36: #{_patched_inputs_impl.1} parent=31 // pred_fallthru
        _
      // Predicated region
      $region37: #{_patched_inputs_impl.1} parent=31 // pred_check
        %p321 = pneg %p152
      $region38: #{_patched_inputs_impl.1} parent=31 // pred_check_branch
        %323 = sbr.rel (%p321) target = $region40
      $region39: #{_patched_inputs_impl.1} parent=31 // pred_region
        _
      $region40: #{_patched_inputs_impl.1} parent=31 // pred_fallthru
        _
    $region32: #{_patched_inputs_impl.1} parent=5 // pred_fallthru
      _
    %p324 = scmp.le.s32.totalorder 2, %s12
    // Predicated region
    $region41: #{_patched_inputs_impl.1} parent=5 // pred_check
      %p325 = pneg %p324
    $region42: #{_patched_inputs_impl.1} parent=5 // pred_check_branch
      %327 = sbr.rel (%p325) target = $region44
    $region43: #{_patched_inputs_impl.1} parent=5 // pred_region
      %s328 = ssub.s32 %s12, 2
      // Predicated region
      $region45: #{_patched_inputs_impl.1} parent=43 // pred_check
        %p329 = pneg %p130
      $region46: #{_patched_inputs_impl.1} parent=43 // pred_check_branch
        %331 = sbr.rel (%p329) target = $region48
      $region47: #{_patched_inputs_impl.1} parent=43 // pred_region
        %p332 = scmp.lt.s32.totalorder %s24, 2
        %s333 = scalar_select %p332, %s24, 2
        %p334 = scmp.lt.s32.totalorder %s23, 0
        %s335 = scalar_select %p334, %s23, 0
        %s336 = smul.addr %s333, 6
        %s337 = sadd.s32 %s335, %s336
        %s338 = smul.addr %s337, 2
        %s339 = scalar_lea.vmem %s3, %s338
      $region48: #{_patched_inputs_impl.1} parent=43 // pred_fallthru
        _
      // Predicated region
      $region49: #{_patched_inputs_impl.1} parent=43 // pred_check
        %p340 = pneg %p158
      $region50: #{_patched_inputs_impl.1} parent=43 // pred_check_branch
        %342 = sbr.rel (%p340) target = $region52
      $region51: #{_patched_inputs_impl.1} parent=43 // pred_region
        %p343 = scmp.lt.s32.totalorder %s24, 2
        %s344 = scalar_select %p343, %s24, 2
        %p345 = scmp.lt.s32.totalorder %s23, 0
        %s346 = scalar_select %p345, %s23, 0
        %s347 = smul.addr %s344, 2
        %s348 = sadd.s32 %s346, %s347
        %s349 = smul.addr %s348, 2
        %s350 = scalar_lea.vmem %s4, %s349
      $region52: #{_patched_inputs_impl.1} parent=43 // pred_fallthru
        _
    $region44: #{_patched_inputs_impl.1} parent=5 // pred_fallthru
      _
  $region6: #{_patched_inputs_impl.1} parent=0 // loop_footer
    %s16 = sadd.s32 1, %s12
  $region7: #{_patched_inputs_impl.1} parent=0 // loop_footer_branch
    %11 = sbr.rel target = $region3
  $region8: #{_patched_inputs_impl.1} parent=0 // loop_exit
    _

</llo_original>
